<compile_context>
chip_gen: v7x
topology: tpu7x:2x2x1
jax: 0.10.0
libtpu: 0.0.40
codegen_flags: <defaults>
</compile_context>

<pallas_src>
import functools
import math

import jax
import jax.numpy as jnp
from jax import lax
from jax.experimental import pallas as pl
from jax.experimental.pallas import tpu as pltpu


def _ppe_kernel(seed_ref, x_ref, pe_ref, o_ref, *, drop_threshold, keep_scale, training):
    """seed_ref: SMEM (1,) int32; x_ref/o_ref: (1, TS, D); pe_ref: (TS, D)."""
    y = x_ref[0] + pe_ref[...]                      # (TS, D) elementwise add

    if training and drop_threshold > 0:
        s = pl.program_id(0)                        # seq-tile index (outer axis)
        b = pl.program_id(1)                        # batch index    (inner axis)
        ts, d = y.shape

        # Unique global element id for every (batch, seq_pos, feature).
        row = lax.broadcasted_iota(jnp.int32, (ts, d), 0)
        col = lax.broadcasted_iota(jnp.int32, (ts, d), 1)
        seq_pad = pl.num_programs(0) * ts
        gid = ((b * seq_pad + s * ts + row) * d + col).astype(jnp.uint32)

        # Counter-based hash RNG (lowbias32 finalizer) -> uniform uint32.
        seed_u = seed_ref[0].astype(jnp.uint32)
        h = gid ^ (seed_u * jnp.uint32(0x9E3779B9))
        h = h ^ (h >> 16)
        h = h * jnp.uint32(0x7FEB352D)
        h = h ^ (h >> 15)
        h = h * jnp.uint32(0x846CA68B)
        h = h ^ (h >> 16)

        keep = h >= jnp.uint32(drop_threshold)      # P(keep) = 1 - p
        y = jnp.where(keep, y * keep_scale, jnp.zeros_like(y))

    o_ref[0] = y.astype(o_ref.dtype)


def make_pe_table(d_model, period=25, max_seq_len=600, dtype=jnp.float32):
    """Replicates the buffer built in PeriodicPositionalEncoding.__init__."""
    position = jnp.arange(period, dtype=jnp.float32)[:, None]               # (period, 1)
    div_term = jnp.exp(
        jnp.arange(0, d_model, 2, dtype=jnp.float32) * (-math.log(10000.0) / d_model)
    )                                                                        # (d_model/2,)
    sin_part = jnp.sin(position * div_term)                                  # (period, d/2)
    cos_part = jnp.cos(position * div_term)                                  # (period, d/2)
    pe = jnp.stack([sin_part, cos_part], axis=-1).reshape(period, d_model)   # interleave
    repeat_num = max_seq_len // period + 1
    pe = jnp.tile(pe[None, :, :], (1, repeat_num, 1))                        # (1, period*rep, d)
    return pe.astype(dtype)


def _choose_seq_tile(S, D, itemsize, target_bytes=2 * 1024 * 1024):
    """Largest multiple-of-8 row count whose (rows, D) tile is <= ~target_bytes."""
    if S <= 8:
        return S
    rows = target_bytes // max(1, D * itemsize)
    rows = min(S, max(8, rows))
    rows = (rows // 8) * 8
    return S if rows >= S else rows


def periodic_positional_encoding(x, pe, *, dropout_p=0.1, training=False, seed=0,
                                 seq_tile=None):
    """x: (B, S, D); pe: (1, >=S, D). Returns dropout(x + pe[:, :S, :])."""
    B, S, D = x.shape
    pe_slice = pe[0, :S, :].astype(x.dtype)          # (S, D); static slice, plain-JAX glue

    itemsize = jnp.dtype(x.dtype).itemsize
    ts = int(seq_tile) if seq_tile is not None else _choose_seq_tile(S, D, itemsize)
    num_s = pl.cdiv(S, ts)

    p = float(dropout_p)
    use_dropout = bool(training) and p > 0.0
    drop_threshold = min(int(round(p * 4294967296.0)), 4294967295) if use_dropout else 0
    keep_scale = 1.0 / (1.0 - p) if p < 1.0 else 0.0

    kernel = functools.partial(
        _ppe_kernel,
        drop_threshold=drop_threshold,
        keep_scale=keep_scale,
        training=use_dropout,
    )
    seed_arr = jnp.asarray([seed], dtype=jnp.int32)

    return pl.pallas_call(
        kernel,
        out_shape=jax.ShapeDtypeStruct((B, S, D), x.dtype),
        grid=(num_s, B),                              # seq tiles outer, batch inner
        in_specs=[
            pl.BlockSpec(memory_space=pltpu.MemorySpace.SMEM),      # seed scalar
            pl.BlockSpec((1, ts, D), lambda s, b: (b, s, 0)),       # x tile
            pl.BlockSpec((ts, D), lambda s, b: (s, 0)),             # pe tile (resident over b)
        ],
        out_specs=pl.BlockSpec((1, ts, D), lambda s, b: (b, s, 0)),
        compiler_params=pltpu.CompilerParams(
            dimension_semantics=("parallel", "parallel")),
    )(seed_arr, x, pe_slice)


if __name__ == "__main__":
    # Small but lane-dense shapes (D multiple of 128); module-default PE params.
    B, S, D = 2, 64, 128
    dropout_p = 0.1

    key = jax.random.PRNGKey(0)
    x = jax.random.normal(key, (B, S, D), dtype=jnp.float32)
    pe = make_pe_table(D, period=25, max_seq_len=600)

    ref = x + pe[:, :S, :]

    # Eval mode: dropout is identity -> must match the reference add.
    out_eval = jax.block_until_ready(
        periodic_positional_encoding(x, pe, dropout_p=dropout_p, training=False))
    assert out_eval.shape == (B, S, D)
    assert jnp.allclose(out_eval, ref, atol=1e-6, rtol=1e-6), "eval mismatch vs x + pe"

    # Same result when the sequence axis is explicitly tiled.
    out_tiled = jax.block_until_ready(
        periodic_positional_encoding(x, pe, dropout_p=dropout_p, training=False, seq_tile=8))
    assert jnp.allclose(out_tiled, ref, atol=1e-6, rtol=1e-6), "tiled eval mismatch"

    # Training mode: inverted dropout -> every element is 0 or (x+pe)/(1-p).
    out_train = jax.block_until_ready(
        periodic_positional_encoding(x, pe, dropout_p=dropout_p, training=True, seed=123))
    assert out_train.shape == (B, S, D)
    scaled = ref * (1.0 / (1.0 - dropout_p))
    zeroed = jnp.isclose(out_train, 0.0, atol=1e-6)
    kept = jnp.isclose(out_train, scaled, rtol=1e-5, atol=1e-5)
    assert bool(jnp.all(zeroed | kept)), "training output not in {0, (x+pe)/(1-p)}"
    drop_rate = float(jnp.mean(zeroed.astype(jnp.float32)))
    assert 0.02 <= drop_rate <= 0.25, f"dropout rate {drop_rate} far from p={dropout_p}"

    print("KERNEL_OK")
</pallas_src>

<mosaic_0001>
module attributes {stable_mosaic.version = 11 : i64} {
  func.func @_ppe_kernel(%arg0: i32, %arg1: i32, %arg2: memref<1xi32, #tpu.memory_space<smem>>, %arg3: memref<1x64x128xf32, #tpu.memory_space<vmem>>, %arg4: memref<64x128xf32, #tpu.memory_space<vmem>>, %arg5: memref<1x64x128xf32, #tpu.memory_space<vmem>>) attributes {dimension_semantics = [#tpu.dimension_semantics<parallel>, #tpu.dimension_semantics<parallel>], iteration_bounds = array<i64: 1, 2>, scalar_prefetch = 0 : i64, scratch_operands = 0 : i64, tpu.core_type = #tpu.core_type<tc>, window_params = [{transform_indices = @transform_0, window_bounds = array<i64: 1>}, {transform_indices = @transform_1, window_bounds = array<i64: 1, 64, 128>}, {transform_indices = @transform_2, window_bounds = array<i64: 64, 128>}, {transform_indices = @transform_3, window_bounds = array<i64: 1, 64, 128>}]} {
    %c0 = arith.constant 0 : index
    %c0_0 = arith.constant 0 : index
    %c0_1 = arith.constant 0 : index
    %0 = vector.load %arg3[%c0, %c0_0, %c0_1] : memref<1x64x128xf32, #tpu.memory_space<vmem>>, vector<1x64x128xf32>
    %1 = vector.shape_cast %0 : vector<1x64x128xf32> to vector<64x128xf32>
    %c0_2 = arith.constant 0 : index
    %c0_3 = arith.constant 0 : index
    %2 = vector.load %arg4[%c0_2, %c0_3] : memref<64x128xf32, #tpu.memory_space<vmem>>, vector<64x128xf32>
    %3 = arith.addf %1, %2 : vector<64x128xf32>
    %c0_4 = arith.constant 0 : index
    %c0_5 = arith.constant 0 : index
    %c0_6 = arith.constant 0 : index
    %4 = vector.load %arg5[%c0_4, %c0_5, %c0_6] : memref<1x64x128xf32, #tpu.memory_space<vmem>>, vector<1x64x128xf32>
    %5 = vector.shape_cast %4 : vector<1x64x128xf32> to vector<64x128xf32>
    %6 = vector.shape_cast %3 : vector<64x128xf32> to vector<1x64x128xf32>
    tpu.vector_store %arg5[%c0_4, %c0_5, %c0_6], %6 {strides = array<i32>} : memref<1x64x128xf32, #tpu.memory_space<vmem>>, vector<1x64x128xf32>,
    return
  }
  func.func @transform_0(%arg0: i32, %arg1: i32) -> i32 {
    %c0_i32 = arith.constant 0 : i32
    %c0_i32_0 = arith.constant 0 : i32
    return %c0_i32 : i32
  }
  func.func @transform_1(%arg0: i32, %arg1: i32) -> (i32, i32, i32) {
    %c0_i32 = arith.constant 0 : i32
    %c0_i32_0 = arith.constant 0 : i32
    return %arg1, %arg0, %c0_i32 : i32, i32, i32
  }
  func.func @transform_2(%arg0: i32, %arg1: i32) -> (i32, i32) {
    %c0_i32 = arith.constant 0 : i32
    %c0_i32_0 = arith.constant 0 : i32
    return %arg0, %c0_i32 : i32, i32
  }
  func.func @transform_3(%arg0: i32, %arg1: i32) -> (i32, i32, i32) {
    %c0_i32 = arith.constant 0 : i32
    %c0_i32_0 = arith.constant 0 : i32
    return %arg1, %arg0, %c0_i32 : i32, i32, i32
  }
}

</mosaic_0001>

<llo_original>
// kernel: tpu_custom_call.1
$region0: #{tpu_custom_call.1}
  #allocation0 [shape = 'u32[]', space=smem, size = 0x4, offset = 0x4, fixed_abs, tag = 'smem constant byte address 0x4 - core index']
  #allocation1 [shape = 'u32[144,128]{1,0:T(1,128)}', space=vmem, size = 0x12000, scoped, tag = 'internal scratch']
  #allocation2 [shape = 's32[1]{0:T(128)S(6)}', space=smem, size = 0x200, scoped, tag = 'scoped memory for tpu_custom_call.1']
  %s0 = inlined_call_operand.<no memory space> [shape: s32[1], index: 0, kind: input, shape index: {}]
  %s1 = inlined_call_operand.hbm [shape: f32[2,64,128], index: 1, kind: input, shape index: {}]
  %s2 = inlined_call_operand.hbm [shape: f32[64,128], index: 2, kind: input, shape index: {}]
  %s3 = inlined_call_operand.hbm [shape: f32[2,64,128], index: 3, kind: output, shape index: {}]
  %s4 = sld [smem:[#allocation0]]
  $region53: #{tpu_custom_call.1} parent=0
    _
  %s6 = ssub.s32 1, %s4
  %s7 = scalar_select 0, %s6, %s4
  %8 = sst [smem:[#allocation2]] %s0
  $region1: #{tpu_custom_call.1} parent=0
    #allocation3 [shape = 'u8[65536]{0}', space=vmem, size = 0x10000, scoped, tag = 'input window, operand 1']
    #allocation4 [shape = 's32[2]{0}', space=sflag, size = 0x8, scoped, tag = 'scoped memory for tpu_custom_call.1']
    #allocation5 [shape = 's32[2]{0}', space=sflag, size = 0x8, scoped, tag = 'scoped memory for tpu_custom_call.1']
    #allocation6 [shape = 'u8[32768]{0}', space=vmem, size = 0x8000, scoped, tag = 'input window, operand 2, single buffered']
    #allocation7 [shape = 's32[1]{0}', space=sflag, size = 0x4, scoped, tag = 'scoped memory for tpu_custom_call.1']
    #allocation8 [shape = 'u8[65536]{0}', space=vmem, size = 0x10000, scoped, tag = 'output window, operand 0']
    %9 = vsyncpa [#allocation4], 0
    %s10 = scalar_lea.sflag [#allocation4], 1
    %11 = vsyncpa %s10, 0
    %12 = vsyncpa [#allocation7], 0
    %13 = vsyncpa [#allocation5], 0
    %s14 = scalar_lea.sflag [#allocation5], 1
    %15 = vsyncpa %s14, 0
    loop: start=0, step=1, limit=4
    $region2: #{tpu_custom_call.1} parent=1 // loop_pre_header
      _
    $region3: #{tpu_custom_call.1} parent=1 // loop_header
      %s17 = sphi 0, %s21
      %p18 = scmp.ge.s32.totalorder %s17, 4
      %s24 = sphi 0, %s36
      %s25 = sphi 0, %s32
      %s26 = sphi 0, %s24
      %s27 = sphi 0, %s25
      %s28 = sphi 0, %s26
      %s29 = sphi 0, %s27
      %s37 = sphi 0, %s37
      %s39 = sphi 0, %s37
      %s40 = sphi 0, %s39
      %s54 = sphi 0, %s40
      %s62 = sphi 0, %s64
      %s65 = sphi 0, %s62
      %s66 = sphi 0, %s65
      %s82 = sphi 0, %s66
      %s88 = sphi 0, %s90
      %s91 = sphi 0, %s88
      %s92 = sphi 0, %s91
      %s108 = sphi 0, %s92
      %s116 = sphi 0, %s118
      %s119 = sphi 0, %s116
      %s120 = sphi 0, %s119
      %s136 = sphi 0, %s120
    $region4: #{tpu_custom_call.1} parent=1 // loop_header_branch
      %20 = sbr.rel (%p18) target = $region8
    $region5: #{tpu_custom_call.1} parent=1 // loop_body
      %s22 = ssub.s32 %s17, 1
      %s23 = ssub.s32 %s17, 2
      %s30 = sadd.s32 1, %s25
      %p31 = scmp.ge.s32.totalorder %s30, 2
      %s32 = scalar_select %p31, 0, %s30
      %s33 = sadd.s32 1, %s24
      %s34 = scalar_select %p31, %s33, %s24
      %p35 = scmp.ge.s32.totalorder %s34, 1
      %s36 = scalar_select %p35, 0, %s34
      %s38 = sadd.s32 %s37, 1
      %p41 = scmp.eq.s32.totalorder %s17, 1
      %p42 = scmp.ne.s32.totalorder %s37, %s39
      %p43 = scmp.eq.s32.totalorder %s17, 0
      %p44 = por %p42, %p43
      %p45 = scmp.ne.s32.totalorder %s37, %s39
      %p46 = scmp.eq.s32.totalorder %s22, 1
      %p47 = por %p45, %p46
      %p48 = scmp.ne.s32.totalorder %s39, %s40
      %p49 = scmp.eq.s32.totalorder %s22, 0
      %p50 = por %p48, %p49
      %p51 = scmp.ne.s32.totalorder %s39, %s40
      %p52 = scmp.eq.s32.totalorder %s23, 1
      %p53 = por %p51, %p52
      %p55 = scmp.ne.s32.totalorder %s40, %s54
      %p56 = scmp.eq.s32.totalorder %s23, 0
      %p57 = por %p55, %p56
      %s58 = ssub.s32 %s25, %s32
      %s59 = ssub.s32 %s24, %s36
      %s60 = sor.u32 %s58, %s59
      %p61 = scmp.eq.s32.totalorder %s60, 0
      %s63 = sadd.s32 %s62, 1
      %s64 = scalar_select %p61, %s62, %s63
      %p67 = pneg %p61
      %p68 = scmp.eq.s32.totalorder %s17, 1
      %p69 = por %p67, %p68
      %p70 = scmp.ne.s32.totalorder %s62, %s65
      %p71 = scmp.eq.s32.totalorder %s17, 0
      %p72 = por %p70, %p71
      %p73 = scmp.ne.s32.totalorder %s62, %s65
      %p74 = scmp.eq.s32.totalorder %s22, 1
      %p75 = por %p73, %p74
      %p76 = scmp.ne.s32.totalorder %s65, %s66
      %p77 = scmp.eq.s32.totalorder %s22, 0
      %p78 = por %p76, %p77
      %p79 = scmp.ne.s32.totalorder %s65, %s66
      %p80 = scmp.eq.s32.totalorder %s23, 1
      %p81 = por %p79, %p80
      %p83 = scmp.ne.s32.totalorder %s66, %s82
      %p84 = scmp.eq.s32.totalorder %s23, 0
      %p85 = por %p83, %p84
      %s86 = ssub.s32 %s24, %s36
      %p87 = scmp.eq.s32.totalorder %s86, 0
      %s89 = sadd.s32 %s88, 1
      %s90 = scalar_select %p87, %s88, %s89
      %p93 = pneg %p87
      %p94 = scmp.eq.s32.totalorder %s17, 1
      %p95 = por %p93, %p94
      %p96 = scmp.ne.s32.totalorder %s88, %s91
      %p97 = scmp.eq.s32.totalorder %s17, 0
      %p98 = por %p96, %p97
      %p99 = scmp.ne.s32.totalorder %s88, %s91
      %p100 = scmp.eq.s32.totalorder %s22, 1
      %p101 = por %p99, %p100
      %p102 = scmp.ne.s32.totalorder %s91, %s92
      %p103 = scmp.eq.s32.totalorder %s22, 0
      %p104 = por %p102, %p103
      %p105 = scmp.ne.s32.totalorder %s91, %s92
      %p106 = scmp.eq.s32.totalorder %s23, 1
      %p107 = por %p105, %p106
      %p109 = scmp.ne.s32.totalorder %s92, %s108
      %p110 = scmp.eq.s32.totalorder %s23, 0
      %p111 = por %p109, %p110
      %s112 = ssub.s32 %s25, %s32
      %s113 = ssub.s32 %s24, %s36
      %s114 = sor.u32 %s112, %s113
      %p115 = scmp.eq.s32.totalorder %s114, 0
      %s117 = sadd.s32 %s116, 1
      %s118 = scalar_select %p115, %s116, %s117
      %p121 = pneg %p115
      %p122 = scmp.eq.s32.totalorder %s17, 1
      %p123 = por %p121, %p122
      %p124 = scmp.ne.s32.totalorder %s116, %s119
      %p125 = scmp.eq.s32.totalorder %s17, 0
      %p126 = por %p124, %p125
      %p127 = scmp.ne.s32.totalorder %s116, %s119
      %p128 = scmp.eq.s32.totalorder %s22, 1
      %p129 = por %p127, %p128
      %p130 = scmp.ne.s32.totalorder %s119, %s120
      %p131 = scmp.eq.s32.totalorder %s22, 0
      %p132 = por %p130, %p131
      %p133 = scmp.ne.s32.totalorder %s119, %s120
      %p134 = scmp.eq.s32.totalorder %s23, 1
      %p135 = por %p133, %p134
      %p137 = scmp.ne.s32.totalorder %s120, %s136
      %p138 = scmp.eq.s32.totalorder %s23, 0
      %p139 = por %p137, %p138
      %p140 = scmp.le.s32.totalorder 1, %s17
      %p141 = scmp.lt.s32.totalorder %s17, 3
      %p142 = pnand %p140, %p141
      %p143 = pneg %p142
      // Predicated region
      $region9: #{tpu_custom_call.1} parent=5 // pred_check
        _
      $region10: #{tpu_custom_call.1} parent=5 // pred_check_branch
        %145 = sbr.rel (%p142) target = $region12
      $region11: #{tpu_custom_call.1} parent=5 // pred_region
        %s146 = ssub.s32 %s17, 1
        // Predicated region
        $region13: #{tpu_custom_call.1} parent=11 // pred_check
          %p147 = pneg %p50
        $region14: #{tpu_custom_call.1} parent=11 // pred_check_branch
          %149 = sbr.rel (%p147) target = $region16
        $region15: #{tpu_custom_call.1} parent=11 // pred_region
          _
        $region16: #{tpu_custom_call.1} parent=11 // pred_fallthru
          _
        // Predicated region
        $region17: #{tpu_custom_call.1} parent=11 // pred_check
          %p150 = pneg %p104
        $region18: #{tpu_custom_call.1} parent=11 // pred_check_branch
          %152 = sbr.rel (%p150) target = $region20
        $region19: #{tpu_custom_call.1} parent=11 // pred_region
          %s153 = smul.u32 8, %s26
          %s155 = ssub.s32 1024, 1024
          %156 = vsyncadd [#allocation7], %s155
          %s157 = smul.addr %s153, 128
          %s158 = scalar_lea.hbm %s2, %s157
          %s159 = sshll.u32 [#allocation6], 4
          %s160 = int_to_ptr.vmem [resolvable:$true] %s159
          %165 = dma.hbm_to_vmem [thread:$0]  %s158, 1024, %s160, [#allocation7], 128, 128, 8
        $region20: #{tpu_custom_call.1} parent=11 // pred_fallthru
          _
      $region12: #{tpu_custom_call.1} parent=5 // pred_fallthru
        _
      %p166 = scmp.lt.s32.totalorder %s17, 2
      // Predicated region
      $region21: #{tpu_custom_call.1} parent=5 // pred_check
        %p167 = pneg %p166
      $region22: #{tpu_custom_call.1} parent=5 // pred_check_branch
        %169 = sbr.rel (%p167) target = $region24
      $region23: #{tpu_custom_call.1} parent=5 // pred_region
        // Predicated region
        $region25: #{tpu_custom_call.1} parent=23 // pred_check
          %p170 = pneg %p72
        $region26: #{tpu_custom_call.1} parent=23 // pred_check_branch
          %172 = sbr.rel (%p170) target = $region28
        $region27: #{tpu_custom_call.1} parent=23 // pred_region
          %s173 = sand.u32 %s62, 1
          %s174 = scalar_lea.sflag [#allocation4], %s173
          %s175 = sand.u32 %s62, 1
          %s176 = smul.addr %s175, 64
          %s177 = scalar_lea.vmem [#allocation3], %s176
          %s178 = smul.u32 8, %s24
          %s180 = ssub.s32 1024, 1024
          %181 = vsyncadd %s174, %s180
          %s182 = smul.addr %s25, 8
          %s183 = sadd.s32 %s178, %s182
          %s184 = smul.addr %s183, 128
          %s185 = scalar_lea.hbm %s1, %s184
          %s186 = sshll.u32 %s177, 4
          %s187 = int_to_ptr.vmem [resolvable:$true] %s186
          %192 = dma.hbm_to_vmem [thread:$0]  %s185, 1024, %s187, %s174, 128, 128, 8
        $region28: #{tpu_custom_call.1} parent=23 // pred_fallthru
          _
      $region24: #{tpu_custom_call.1} parent=5 // pred_fallthru
        _
      %p193 = scmp.le.s32.totalorder 1, %s17
      %p194 = scmp.lt.s32.totalorder %s17, 3
      %p195 = pnand %p193, %p194
      %p196 = pneg %p195
      // Predicated region
      $region29: #{tpu_custom_call.1} parent=5 // pred_check
        _
      $region30: #{tpu_custom_call.1} parent=5 // pred_check_branch
        %198 = sbr.rel (%p195) target = $region32
      $region31: #{tpu_custom_call.1} parent=5 // pred_region
        %s199 = ssub.s32 %s17, 1
        %s200 = sand.u32 %s65, 1
        %s201 = scalar_lea.sflag [#allocation4], %s200
        %s202 = sand.u32 %s65, 1
        %s203 = smul.addr %s202, 64
        %s204 = scalar_lea.vmem [#allocation3], %s203
        // Predicated region
        $region33: #{tpu_custom_call.1} parent=31 // pred_check
          %p205 = pneg %p78
        $region34: #{tpu_custom_call.1} parent=31 // pred_check_branch
          %207 = sbr.rel (%p205) target = $region36
        $region35: #{tpu_custom_call.1} parent=31 // pred_region
          %208 = dma.done %s201, 1024
        $region36: #{tpu_custom_call.1} parent=31 // pred_fallthru
          _
        // Predicated region
        $region37: #{tpu_custom_call.1} parent=31 // pred_check
          %p209 = pneg %p104
        $region38: #{tpu_custom_call.1} parent=31 // pred_check_branch
          %211 = sbr.rel (%p209) target = $region40
        $region39: #{tpu_custom_call.1} parent=31 // pred_region
          %212 = dma.done [#allocation7], 1024
        $region40: #{tpu_custom_call.1} parent=31 // pred_fallthru
          _
        %p213 = pneg %p50
        %p214 = pneg %p47
        %s215 = sand.u32 %s65, 1
        %s216 = scalar_lea.sflag [#allocation4], %s215
        %s217 = sand.u32 %s65, 1
        %s218 = smul.addr %s217, 64
        %s219 = scalar_lea.vmem [#allocation3], %s218
        %p220 = pneg %p78
        %p221 = pneg %p75
        %p222 = pneg %p104
        %p223 = pneg %p101
        %p224 = pneg %p132
        %p225 = pneg %p129
        %s226 = sand.u32 %s119, 1
        %s227 = scalar_lea.sflag [#allocation5], %s226
        %s228 = sand.u32 %s119, 1
        %s229 = smul.addr %s228, 64
        %s230 = scalar_lea.vmem [#allocation8], %s229
        %s231 = smul.u32 8, %s26
        %s232 = smul.u32 8, %s26
        %s233 = smul.u32 8, %s26
        %v234 = vld [vmem:[%s204] sm:$0xff]
        %v235 = vld [vmem:[%s204 + $0x8] sm:$0xff]
        %v236 = vld [vmem:[%s204 + $0x10] sm:$0xff]
        %v237 = vld [vmem:[%s204 + $0x18] sm:$0xff]
        %v238 = vld [vmem:[%s204 + $0x20] sm:$0xff]
        %v239 = vld [vmem:[%s204 + $0x28] sm:$0xff]
        %v240 = vld [vmem:[%s204 + $0x30] sm:$0xff]
        %v241 = vld [vmem:[%s204 + $0x38] sm:$0xff]
        %v242 = vld [vmem:[#allocation6] sm:$0xff]
        %v243 = vld [vmem:[#allocation6 + $0x8] sm:$0xff]
        %v244 = vld [vmem:[#allocation6 + $0x10] sm:$0xff]
        %v245 = vld [vmem:[#allocation6 + $0x18] sm:$0xff]
        %v246 = vld [vmem:[#allocation6 + $0x20] sm:$0xff]
        %v247 = vld [vmem:[#allocation6 + $0x28] sm:$0xff]
        %v248 = vld [vmem:[#allocation6 + $0x30] sm:$0xff]
        %v249 = vld [vmem:[#allocation6 + $0x38] sm:$0xff]
        %v250 = vadd.f32 %v234, %v242
        %v251 = vadd.f32 %v235, %v243
        %v252 = vadd.f32 %v236, %v244
        %v253 = vadd.f32 %v237, %v245
        %v254 = vadd.f32 %v238, %v246
        %v255 = vadd.f32 %v239, %v247
        %v256 = vadd.f32 %v240, %v248
        %v257 = vadd.f32 %v241, %v249
        %258 = vst [vmem:[%s230] sm:$0xff] %v250
        %259 = vst [vmem:[%s230 + $0x8] sm:$0xff] %v251
        %260 = vst [vmem:[%s230 + $0x10] sm:$0xff] %v252
        %261 = vst [vmem:[%s230 + $0x18] sm:$0xff] %v253
        %262 = vst [vmem:[%s230 + $0x20] sm:$0xff] %v254
        %263 = vst [vmem:[%s230 + $0x28] sm:$0xff] %v255
        %264 = vst [vmem:[%s230 + $0x30] sm:$0xff] %v256
        %265 = vst [vmem:[%s230 + $0x38] sm:$0xff] %v257
        %s266 = sand.u32 %s119, 1
        %s267 = scalar_lea.sflag [#allocation5], %s266
        %s268 = sand.u32 %s119, 1
        %s269 = smul.addr %s268, 64
        %s270 = scalar_lea.vmem [#allocation8], %s269
        // Predicated region
        $region41: #{tpu_custom_call.1} parent=31 // pred_check
          %p271 = pneg %p129
        $region42: #{tpu_custom_call.1} parent=31 // pred_check_branch
          %273 = sbr.rel (%p271) target = $region44
        $region43: #{tpu_custom_call.1} parent=31 // pred_region
          %s274 = smul.u32 8, %s26
          %s276 = ssub.s32 1024, 1024
          %277 = vsyncadd %s267, %s276
          %s278 = smul.addr %s27, 8
          %s279 = sadd.s32 %s274, %s278
          %s280 = smul.addr %s279, 128
          %s281 = scalar_lea.hbm %s3, %s280
          %s282 = sshll.u32 %s270, 4
          %s283 = int_to_ptr.vmem [resolvable:$true] %s282
          %288 = dma.vmem_to_hbm [thread:$0]  %s283, 1024, %s281, %s267, 128, 128, 8
        $region44: #{tpu_custom_call.1} parent=31 // pred_fallthru
          _
      $region32: #{tpu_custom_call.1} parent=5 // pred_fallthru
        _
      %p289 = scmp.le.s32.totalorder 2, %s17
      // Predicated region
      $region45: #{tpu_custom_call.1} parent=5 // pred_check
        %p290 = pneg %p289
      $region46: #{tpu_custom_call.1} parent=5 // pred_check_branch
        %292 = sbr.rel (%p290) target = $region48
      $region47: #{tpu_custom_call.1} parent=5 // pred_region
        %s293 = ssub.s32 %s17, 2
        // Predicated region
        $region49: #{tpu_custom_call.1} parent=47 // pred_check
          %p294 = pneg %p135
        $region50: #{tpu_custom_call.1} parent=47 // pred_check_branch
          %296 = sbr.rel (%p294) target = $region52
        $region51: #{tpu_custom_call.1} parent=47 // pred_region
          %s297 = sand.u32 %s120, 1
          %s298 = scalar_lea.sflag [#allocation5], %s297
          %s299 = sand.u32 %s120, 1
          %s300 = smul.addr %s299, 64
          %s301 = scalar_lea.vmem [#allocation8], %s300
          %302 = dma.done %s298, 1024
        $region52: #{tpu_custom_call.1} parent=47 // pred_fallthru
          _
      $region48: #{tpu_custom_call.1} parent=5 // pred_fallthru
        _
    $region6: #{tpu_custom_call.1} parent=1 // loop_footer
      %s21 = sadd.s32 1, %s17
    $region7: #{tpu_custom_call.1} parent=1 // loop_footer_branch
      %16 = sbr.rel target = $region3
    $region8: #{tpu_custom_call.1} parent=1 // loop_exit
      _
    %303 = vsyncpa [#allocation4], 1
    %s304 = scalar_lea.sflag [#allocation4], 1
    %305 = vsyncpa %s304, 1
    %306 = vsyncpa [#allocation7], 1
    %307 = vsyncpa [#allocation5], 1
    %s308 = scalar_lea.sflag [#allocation5], 1
    %309 = vsyncpa %s308, 1

</llo_original>
